<compile_context>
chip_gen: v5e
topology: v5e:2x2
jax: 0.10.0
libtpu: 0.0.40
codegen_flags: <defaults>
</compile_context>

<pallas_src>
import math

import jax
import jax.numpy as jnp
from jax.experimental import pallas as pl
from jax.experimental.pallas import tpu as pltpu


def embedding_kernel(ids_ref, pe_ref, emb_hbm, out_ref, rows_vmem, copy_sems):
    """One grid step = one (batch row, token tile).

    ids_ref:   [B, S] int32 in SMEM (scalar-prefetched index data).
    pe_ref:    [TS, D] positional-encoding tile (auto-pipelined VMEM block).
    emb_hbm:   [V, D] embedding table left in HBM (memory_space=pl.ANY).
    out_ref:   [TS, D] output tile (leading batch dim squeezed away).
    rows_vmem: [TS, D] VMEM scratch receiving the gathered embedding rows.
    copy_sems: [TS] DMA semaphores, one per in-flight row copy.
    """
    b = pl.program_id(0)
    s = pl.program_id(1)
    ts = out_ref.shape[0]          # static token-tile size
    base = s * ts

    # Issue all row DMAs for this tile first (maximize in-flight copies):
    # HBM row gather into VMEM scratch.
    @pl.loop(0, ts)
    def _issue(t):
        tok = ids_ref[b, base + t]
        pltpu.make_async_copy(
            emb_hbm.at[pl.ds(tok, 1), :],
            rows_vmem.at[pl.ds(t, 1), :],
            copy_sems.at[t],
        ).start()

    # Then wait for all of them (the wait descriptor only needs a matching
    # dst/semaphore shape, not the original dynamic source row).
    @pl.loop(0, ts)
    def _wait(t):
        pltpu.make_async_copy(
            emb_hbm.at[pl.ds(0, 1), :],
            rows_vmem.at[pl.ds(t, 1), :],
            copy_sems.at[t],
        ).wait()

    # token embedding + positional encoding (dropout == identity at inference)
    out_ref[...] = (rows_vmem[...] + pe_ref[...]).astype(out_ref.dtype)


def _pick_token_tile(seq_len):
    """Largest tile <=128 that divides S and respects the (8,128) sublane rule.

    If S is not a multiple of 8 we fall back to a single full-S block (a block
    equal to the full array dim is always legal).
    """
    if seq_len % 8 != 0:
        return seq_len
    for cand in (128, 64, 32, 16, 8):
        if seq_len % cand == 0:
            return cand
    return seq_len


def transformer_embedding(ids, emb_table, pe, *, token_tile=None):
    """ids: [B, S] int32, emb_table: [V, D], pe: [max_len, D] -> [B, S, D]."""
    B, S = ids.shape
    V, D = emb_table.shape

    if token_tile is None:
        token_tile = _pick_token_tile(S)
    assert S % token_tile == 0, "token_tile must divide the sequence length"
    n_seq_tiles = S // token_tile

    # Glue (cheap XLA ops outside the kernel): static PE slice + dtype match.
    pe_slice = pe[:S].astype(emb_table.dtype)
    ids = ids.astype(jnp.int32)

    grid_spec = pltpu.PrefetchScalarGridSpec(
        num_scalar_prefetch=1,              # ids -> SMEM, visible to index_maps & kernel
        grid=(B, n_seq_tiles),
        in_specs=[
            # positional encoding, per seq-tile (lane-dense, D last)
            pl.BlockSpec((token_tile, D), lambda b, s, ids_ref: (s, 0)),
            # embedding table stays in HBM; rows gathered via manual DMA
            pl.BlockSpec(memory_space=pl.ANY),
        ],
        out_specs=pl.BlockSpec(
            (pl.Squeezed(), token_tile, D), lambda b, s, ids_ref: (b, s, 0)
        ),
        scratch_shapes=[
            pltpu.VMEM((token_tile, D), emb_table.dtype),
            pltpu.SemaphoreType.DMA((token_tile,)),
        ],
    )

    return pl.pallas_call(
        embedding_kernel,
        out_shape=jax.ShapeDtypeStruct((B, S, D), emb_table.dtype),
        grid_spec=grid_spec,
        compiler_params=pltpu.CompilerParams(
            dimension_semantics=("parallel", "parallel"),
        ),
    )(ids, pe_slice, emb_table)


def build_positional_encoding(d_model, max_len):
    """Replicates PositionalEncoding.__init__ buffer `pe` (shape [max_len, d_model])."""
    pos = jnp.arange(max_len, dtype=jnp.float32)[:, None]                      # [max_len, 1]
    div = jnp.exp(
        jnp.arange(0, d_model, 2, dtype=jnp.float32) * (-math.log(10000.0) / d_model)
    )                                                                          # [d_model/2]
    pe = jnp.zeros((max_len, d_model), dtype=jnp.float32)
    pe = pe.at[:, 0::2].set(jnp.sin(pos * div))
    pe = pe.at[:, 1::2].set(jnp.cos(pos * div))
    return pe


if __name__ == "__main__":
    # Small shapes consistent with the module:
    vocab_size = 32
    d_model = 32
    max_len = 16
    batch = 2
    seq = 8
    # dropout = 0.1  (identity at inference)

    key = jax.random.PRNGKey(0)
    k_emb, k_ids = jax.random.split(key)

    # nn.Embedding default init: N(0, 1)
    emb_table = jax.random.normal(k_emb, (vocab_size, d_model), dtype=jnp.float32)
    pe = build_positional_encoding(d_model, max_len)

    ids = jax.random.randint(k_ids, (batch, seq), 0, vocab_size, dtype=jnp.int32)

    out = transformer_embedding(ids, emb_table, pe)
    out = jax.block_until_ready(out)

    # Pure-JAX reference check of the forward semantics.
    ref = emb_table[ids] + pe[:seq][None, :, :]
    assert out.shape == (batch, seq, d_model)
    assert jnp.allclose(out, ref, atol=1e-5, rtol=1e-5), "mismatch vs reference"

    print("KERNEL_OK")
</pallas_src>

<mosaic_0001>
module attributes {stable_mosaic.version = 11 : i64} {
  func.func @embedding_kernel(%arg0: i32, %arg1: i32, %arg2: memref<2x8xi32, #tpu.memory_space<smem>>, %arg3: memref<8x32xf32, #tpu.memory_space<vmem>>, %arg4: memref<32x32xf32, #tpu.memory_space<any>>, %arg5: memref<1x8x32xf32, #tpu.memory_space<vmem>>, %arg6: memref<8x32xf32, #tpu.memory_space<vmem>>, %arg7: memref<8x!tpu.dma_semaphore, #tpu.memory_space<semaphore_mem>>) attributes {dimension_semantics = [#tpu.dimension_semantics<parallel>, #tpu.dimension_semantics<parallel>], iteration_bounds = array<i64: 2, 1>, scalar_prefetch = 1 : i64, scratch_operands = 2 : i64, tpu.core_type = #tpu.core_type<tc>, window_params = [{transform_indices = @transform_0, window_bounds = array<i64: 8, 32>}, {}, {transform_indices = @transform_2, window_bounds = array<i64: 1, 8, 32>}]} {
    %c8_i32 = arith.constant 8 : i32
    %0 = arith.muli %arg1, %c8_i32 : i32
    %c0_i32 = arith.constant 0 : i32
    %c8_i32_0 = arith.constant 8 : i32
    %1 = arith.addi %c0_i32, %c8_i32_0 : i32
    %c1_i32 = arith.constant 1 : i32
    scf.for %arg8 = %c0_i32 to %1 step %c1_i32  : i32 {
      %c1_i32_12 = arith.constant 1 : i32
      %9 = arith.muli %arg8, %c1_i32_12 : i32
      %c0_i32_13 = arith.constant 0 : i32
      %10 = arith.addi %c0_i32_13, %9 : i32
      %11 = arith.addi %0, %10 : i32
      %12 = arith.index_cast %arg0 : i32 to index
      %13 = arith.index_cast %11 : i32 to index
      %14 = memref.load %arg2[%12, %13] : memref<2x8xi32, #tpu.memory_space<smem>>
      %c0_i32_14 = arith.constant 0 : i32
      %15 = tpu.memref_slice %arg4[%14, %c0_i32_14] : memref<32x32xf32, #tpu.memory_space<any>> -> memref<1x32xf32, #tpu.memory_space<any>>
      %c0_i32_15 = arith.constant 0 : i32
      %16 = tpu.memref_slice %arg6[%10, %c0_i32_15] : memref<8x32xf32, #tpu.memory_space<vmem>> -> memref<1x32xf32, #tpu.memory_space<vmem>>
      %17 = tpu.memref_slice %arg7[%10] : memref<8x!tpu.dma_semaphore, #tpu.memory_space<semaphore_mem>> -> memref<1x!tpu.dma_semaphore, #tpu.memory_space<semaphore_mem>>
      %18 = tpu.memref_squeeze %17 : memref<1x!tpu.dma_semaphore, #tpu.memory_space<semaphore_mem>> -> memref<!tpu.dma_semaphore, #tpu.memory_space<semaphore_mem>>
      tpu.enqueue_dma source(%15 : memref<1x32xf32, #tpu.memory_space<any>>) target(%16 : memref<1x32xf32, #tpu.memory_space<vmem>>) target_semaphore(%18 : memref<!tpu.dma_semaphore, #tpu.memory_space<semaphore_mem>>)
    }
    %c8_i32_1 = arith.constant 8 : i32
    %c0_i32_2 = arith.constant 0 : i32
    %c8_i32_3 = arith.constant 8 : i32
    %2 = arith.addi %c0_i32_2, %c8_i32_3 : i32
    %c1_i32_4 = arith.constant 1 : i32
    scf.for %arg8 = %c0_i32_2 to %2 step %c1_i32_4  : i32 {
      %c1_i32_12 = arith.constant 1 : i32
      %9 = arith.muli %arg8, %c1_i32_12 : i32
      %c0_i32_13 = arith.constant 0 : i32
      %10 = arith.addi %c0_i32_13, %9 : i32
      %c0_i32_14 = arith.constant 0 : i32
      %c0_i32_15 = arith.constant 0 : i32
      %11 = tpu.memref_slice %arg4[%c0_i32_14, %c0_i32_15] : memref<32x32xf32, #tpu.memory_space<any>> -> memref<1x32xf32, #tpu.memory_space<any>>
      %c0_i32_16 = arith.constant 0 : i32
      %12 = tpu.memref_slice %arg6[%10, %c0_i32_16] : memref<8x32xf32, #tpu.memory_space<vmem>> -> memref<1x32xf32, #tpu.memory_space<vmem>>
      %13 = tpu.memref_slice %arg7[%10] : memref<8x!tpu.dma_semaphore, #tpu.memory_space<semaphore_mem>> -> memref<1x!tpu.dma_semaphore, #tpu.memory_space<semaphore_mem>>
      %14 = tpu.memref_squeeze %13 : memref<1x!tpu.dma_semaphore, #tpu.memory_space<semaphore_mem>> -> memref<!tpu.dma_semaphore, #tpu.memory_space<semaphore_mem>>
      tpu.wait_dma2 semaphore(%14 : memref<!tpu.dma_semaphore, #tpu.memory_space<semaphore_mem>>) src(%11 : memref<1x32xf32, #tpu.memory_space<any>>) dst(%12 : memref<1x32xf32, #tpu.memory_space<vmem>>)
    }
    %c8_i32_5 = arith.constant 8 : i32
    %c0 = arith.constant 0 : index
    %c0_6 = arith.constant 0 : index
    %3 = vector.load %arg6[%c0, %c0_6] : memref<8x32xf32, #tpu.memory_space<vmem>>, vector<8x32xf32>
    %c0_7 = arith.constant 0 : index
    %c0_8 = arith.constant 0 : index
    %4 = vector.load %arg3[%c0_7, %c0_8] : memref<8x32xf32, #tpu.memory_space<vmem>>, vector<8x32xf32>
    %5 = arith.addf %3, %4 : vector<8x32xf32>
    %c0_9 = arith.constant 0 : index
    %c0_10 = arith.constant 0 : index
    %c0_11 = arith.constant 0 : index
    %6 = vector.load %arg5[%c0_9, %c0_10, %c0_11] : memref<1x8x32xf32, #tpu.memory_space<vmem>>, vector<1x8x32xf32>
    %7 = vector.shape_cast %6 : vector<1x8x32xf32> to vector<8x32xf32>
    %8 = vector.shape_cast %5 : vector<8x32xf32> to vector<1x8x32xf32>
    tpu.vector_store %arg5[%c0_9, %c0_10, %c0_11], %8 {strides = array<i32>} : memref<1x8x32xf32, #tpu.memory_space<vmem>>, vector<1x8x32xf32>,
    return
  }
  func.func @transform_0(%arg0: i32, %arg1: i32, %arg2: memref<2x8xi32, #tpu.memory_space<smem>>) -> (i32, i32) {
    %c0_i32 = arith.constant 0 : i32
    %c0_i32_0 = arith.constant 0 : i32
    return %arg1, %c0_i32 : i32, i32
  }
  func.func @transform_2(%arg0: i32, %arg1: i32, %arg2: memref<2x8xi32, #tpu.memory_space<smem>>) -> (i32, i32, i32) {
    %c0_i32 = arith.constant 0 : i32
    %c0_i32_0 = arith.constant 0 : i32
    return %arg0, %arg1, %c0_i32 : i32, i32, i32
  }
}

</mosaic_0001>

<llo_original>
// kernel: tpu_custom_call.1
$region0: #{tpu_custom_call.1}
  #allocation0 [shape = 'u32[]', space=smem, size = 0x4, offset = 0x4, fixed_abs, tag = 'smem constant byte address 0x4 - core index']
  #allocation1 [shape = 'u32[72,128]{1,0:T(1,128)}', space=vmem, size = 0x9000, scoped, tag = 'internal scratch']
  #allocation2 [shape = 'f32[8,32]{1,0:T(8,128)}', space=vmem, size = 0x1000, scoped, tag = 'scratch operand']
  #allocation3 [shape = 's32[8]{0}', space=sflag, size = 0x20, scoped, tag = 'scratch operand']
  #allocation4 [shape = 's32[1]{0}', space=sflag, size = 0x4, scoped, tag = 'scoped memory for tpu_custom_call.1']
  #allocation5 [shape = 'u8[1024]{0}', space=smem, size = 0x400, scoped, tag = 'prefetched SMEM operand 0']
  #allocation10 [shape = 's32[]', space=sflag, size = 0x4, offset = 0, fixed_abs, tag = 'sflag constant byte address 0x0 - dummy sync flag']
  #allocation11 [shape = 's32[]', space=sflag, size = 0x4, offset = 0, fixed_abs, tag = 'sflag constant byte address 0x0 - dummy sync flag']
  #allocation12 [shape = 'u32[]', space=smem, size = 0x4, offset = 0x44, fixed_abs, tag = 'smem constant byte address 0x44 - assertion arg 0']
  #allocation13 [shape = 'u32[]', space=smem, size = 0x4, offset = 0x48, fixed_abs, tag = 'smem constant byte address 0x48 - assertion arg 1']
  %s0 = inlined_call_operand.hbm [shape: s32[2,8], index: 0, kind: input, shape index: {}]
  %s1 = inlined_call_operand.hbm [shape: f32[8,32], index: 1, kind: input, shape index: {}]
  %s2 = inlined_call_operand.hbm [shape: f32[32,32], index: 2, kind: input, shape index: {}]
  %s3 = inlined_call_operand.hbm [shape: f32[2,8,32], index: 3, kind: output, shape index: {}]
  %s4 = sld [smem:[#allocation0]]
  $region59: #{tpu_custom_call.1} parent=0
    _
  %s6 = ssub.s32 1, %s4
  %s7 = scalar_select 0, %s6, %s4
  %s9 = sshll.u32 %s0, 4
  %s10 = int_to_ptr.hbm [resolvable:$true] %s9
  %12 = dma.hbm_to_smem %s10, 32, [#allocation5], [#allocation4]
  %14 = dma.done [#allocation4], 32
  %15 = sfence
  $region1: #{tpu_custom_call.1} parent=0
    #allocation6 [shape = 'u8[4096]{0}', space=vmem, size = 0x1000, scoped, tag = 'input window, operand 1, single buffered']
    #allocation7 [shape = 's32[2]{0}', space=sflag, size = 0x8, scoped, tag = 'scoped memory for tpu_custom_call.1']
    #allocation8 [shape = 's32[2]{0}', space=sflag, size = 0x8, scoped, tag = 'scoped memory for tpu_custom_call.1']
    #allocation9 [shape = 'u8[8192]{0}', space=vmem, size = 0x2000, scoped, tag = 'output window, operand 0']
    %16 = vsyncpa [#allocation7], 0
    %17 = vsyncpa [#allocation8], 0
    %s18 = scalar_lea.sflag [#allocation8], 1
    %19 = vsyncpa %s18, 0
    loop: start=0, step=1, limit=4
    $region2: #{tpu_custom_call.1} parent=1 // loop_pre_header
      _
    $region3: #{tpu_custom_call.1} parent=1 // loop_header
      %s21 = sphi 0, %s25
      %p22 = scmp.ge.s32.totalorder %s21, 4
      %s28 = sphi 0, %s40
      %s29 = sphi 0, %s36
      %s30 = sphi 0, %s28
      %s31 = sphi 0, %s29
      %s32 = sphi 0, %s30
      %s33 = sphi 0, %s31
      %s43 = sphi 0, %s45
      %s46 = sphi 0, %s43
      %s47 = sphi 0, %s46
      %s63 = sphi 0, %s47
      %s71 = sphi 0, %s73
      %s74 = sphi 0, %s71
      %s75 = sphi 0, %s74
      %s91 = sphi 0, %s75
    $region4: #{tpu_custom_call.1} parent=1 // loop_header_branch
      %24 = sbr.rel (%p22) target = $region8
    $region5: #{tpu_custom_call.1} parent=1 // loop_body
      %s26 = ssub.s32 %s21, 1
      %s27 = ssub.s32 %s21, 2
      %s34 = sadd.s32 1, %s29
      %p35 = scmp.ge.s32.totalorder %s34, 1
      %s36 = scalar_select %p35, 0, %s34
      %s37 = sadd.s32 1, %s28
      %s38 = scalar_select %p35, %s37, %s28
      %p39 = scmp.ge.s32.totalorder %s38, 2
      %s40 = scalar_select %p39, 0, %s38
      %s41 = ssub.s32 %s29, %s36
      %p42 = scmp.eq.s32.totalorder %s41, 0
      %s44 = sadd.s32 %s43, 1
      %s45 = scalar_select %p42, %s43, %s44
      %p48 = pneg %p42
      %p49 = scmp.eq.s32.totalorder %s21, 1
      %p50 = por %p48, %p49
      %p51 = scmp.ne.s32.totalorder %s43, %s46
      %p52 = scmp.eq.s32.totalorder %s21, 0
      %p53 = por %p51, %p52
      %p54 = scmp.ne.s32.totalorder %s43, %s46
      %p55 = scmp.eq.s32.totalorder %s26, 1
      %p56 = por %p54, %p55
      %p57 = scmp.ne.s32.totalorder %s46, %s47
      %p58 = scmp.eq.s32.totalorder %s26, 0
      %p59 = por %p57, %p58
      %p60 = scmp.ne.s32.totalorder %s46, %s47
      %p61 = scmp.eq.s32.totalorder %s27, 1
      %p62 = por %p60, %p61
      %p64 = scmp.ne.s32.totalorder %s47, %s63
      %p65 = scmp.eq.s32.totalorder %s27, 0
      %p66 = por %p64, %p65
      %s67 = ssub.s32 %s28, %s40
      %s68 = ssub.s32 %s29, %s36
      %s69 = sor.u32 %s67, %s68
      %p70 = scmp.eq.s32.totalorder %s69, 0
      %s72 = sadd.s32 %s71, 1
      %s73 = scalar_select %p70, %s71, %s72
      %p76 = pneg %p70
      %p77 = scmp.eq.s32.totalorder %s21, 1
      %p78 = por %p76, %p77
      %p79 = scmp.ne.s32.totalorder %s71, %s74
      %p80 = scmp.eq.s32.totalorder %s21, 0
      %p81 = por %p79, %p80
      %p82 = scmp.ne.s32.totalorder %s71, %s74
      %p83 = scmp.eq.s32.totalorder %s26, 1
      %p84 = por %p82, %p83
      %p85 = scmp.ne.s32.totalorder %s74, %s75
      %p86 = scmp.eq.s32.totalorder %s26, 0
      %p87 = por %p85, %p86
      %p88 = scmp.ne.s32.totalorder %s74, %s75
      %p89 = scmp.eq.s32.totalorder %s27, 1
      %p90 = por %p88, %p89
      %p92 = scmp.ne.s32.totalorder %s75, %s91
      %p93 = scmp.eq.s32.totalorder %s27, 0
      %p94 = por %p92, %p93
      %p95 = scmp.le.s32.totalorder 1, %s21
      %p96 = scmp.lt.s32.totalorder %s21, 3
      %p97 = pnand %p95, %p96
      %p98 = pneg %p97
      // Predicated region
      $region9: #{tpu_custom_call.1} parent=5 // pred_check
        _
      $region10: #{tpu_custom_call.1} parent=5 // pred_check_branch
        %100 = sbr.rel (%p97) target = $region12
      $region11: #{tpu_custom_call.1} parent=5 // pred_region
        %s101 = ssub.s32 %s21, 1
        // Predicated region
        $region13: #{tpu_custom_call.1} parent=11 // pred_check
          %p102 = pneg %p59
        $region14: #{tpu_custom_call.1} parent=11 // pred_check_branch
          %104 = sbr.rel (%p102) target = $region16
        $region15: #{tpu_custom_call.1} parent=11 // pred_region
          %106 = vsyncadd [#allocation7], 0
          %s107 = smul.addr %s31, 8
          %s108 = scalar_lea.hbm %s1, %s107
          %s110 = sshll.u32 %s108, 4
          %s111 = int_to_ptr.hbm [resolvable:$true] %s110
          %s112 = sshll.u32 [#allocation6], 4
          %s113 = int_to_ptr.vmem [resolvable:$true] %s112
          %115 = dma.hbm_to_vmem [thread:$0]  %s111, 128, %s113, [#allocation7]
        $region16: #{tpu_custom_call.1} parent=11 // pred_fallthru
          _
      $region12: #{tpu_custom_call.1} parent=5 // pred_fallthru
        _
      %p116 = scmp.lt.s32.totalorder %s21, 2
      // Predicated region
      $region17: #{tpu_custom_call.1} parent=5 // pred_check
        %p117 = pneg %p116
      $region18: #{tpu_custom_call.1} parent=5 // pred_check_branch
        %119 = sbr.rel (%p117) target = $region20
      $region19: #{tpu_custom_call.1} parent=5 // pred_region
        _
      $region20: #{tpu_custom_call.1} parent=5 // pred_fallthru
        _
      %p120 = scmp.le.s32.totalorder 1, %s21
      %p121 = scmp.lt.s32.totalorder %s21, 3
      %p122 = pnand %p120, %p121
      %p123 = pneg %p122
      // Predicated region
      $region21: #{tpu_custom_call.1} parent=5 // pred_check
        _
      $region22: #{tpu_custom_call.1} parent=5 // pred_check_branch
        %125 = sbr.rel (%p122) target = $region24
      $region23: #{tpu_custom_call.1} parent=5 // pred_region
        %s126 = ssub.s32 %s21, 1
        // Predicated region
        $region25: #{tpu_custom_call.1} parent=23 // pred_check
          %p127 = pneg %p59
        $region26: #{tpu_custom_call.1} parent=23 // pred_check_branch
          %129 = sbr.rel (%p127) target = $region28
        $region27: #{tpu_custom_call.1} parent=23 // pred_region
          %131 = dma.done [#allocation7], 128
        $region28: #{tpu_custom_call.1} parent=23 // pred_fallthru
          _
        %p132 = pneg %p59
        %p133 = pneg %p56
        %p134 = pneg %p87
        %p135 = pneg %p84
        %s136 = sand.u32 %s74, 1
        %s137 = scalar_lea.sflag [#allocation8], %s136
        %s138 = sand.u32 %s74, 1
        %s139 = smul.addr %s138, 8
        %s140 = scalar_lea.vmem [#allocation9], %s139
        %s141 = smul.u32 %s31, 8
        loop: start=0, step=1, limit=8
        $region29: #{tpu_custom_call.1} parent=23 // loop_pre_header
          _
        $region30: #{tpu_custom_call.1} parent=23 // loop_header
          %s143 = sphi 0, %s147
          %p144 = scmp.ge.s32.totalorder %s143, 8
        $region31: #{tpu_custom_call.1} parent=23 // loop_header_branch
          %146 = sbr.rel (%p144) target = $region35
        $region32: #{tpu_custom_call.1} parent=23 // loop_body
          %s148 = sadd.s32 %s141, %s143
          %s149 = sshra.s32 %s148, 7
          %s150 = sand.u32 %s148, 127
          %s151 = sadd.s32 %s149, %s30
          %s152 = smul.u32 %s151, 128
          %s153 = sshra.s32 %s148, 7
          %s154 = sand.u32 %s148, 127
          %s155 = sadd.s32 %s152, %s154
          %s156 = sld [smem:[#allocation5 + %s155]]
          %s157 = scalar_lea.hbm %s2, %s156
          %s158 = scalar_lea.vmem [#allocation2], %s143
          %s159 = scalar_lea.sflag [#allocation3], %s143
          // Predicated region
          $region36: #{tpu_custom_call.1} parent=32 // pred_check
            _
          $region37: #{tpu_custom_call.1} parent=32 // pred_check_branch
            %161 = sbr.rel target = $region39
          $region38: #{tpu_custom_call.1} parent=32 // pred_region
            %162 = sst [smem:[#allocation12]] [#allocation11]
            %163 = sst [smem:[#allocation13]] [#allocation10]
          $region39: #{tpu_custom_call.1} parent=32 // pred_fallthru
            _
          %165 = shalt.err (0)
          %s167 = sshll.u32 %s157, 4
          %s168 = int_to_ptr.hbm [resolvable:$true] %s167
          %s169 = sshll.u32 %s158, 4
          %s170 = int_to_ptr.vmem [resolvable:$true] %s169
          %172 = dma.hbm_to_vmem [thread:$0]  %s168, 16, %s170, %s159
        $region33: #{tpu_custom_call.1} parent=23 // loop_footer
          %s147 = sadd.s32 1, %s143
        $region34: #{tpu_custom_call.1} parent=23 // loop_footer_branch
          %142 = sbr.rel target = $region30
        $region35: #{tpu_custom_call.1} parent=23 // loop_exit
          _
        loop: start=0, step=1, limit=8
        $region40: #{tpu_custom_call.1} parent=23 // loop_pre_header
          _
        $region41: #{tpu_custom_call.1} parent=23 // loop_header
          %s174 = sphi 0, %s178
          %p175 = scmp.ge.s32.totalorder %s174, 8
        $region42: #{tpu_custom_call.1} parent=23 // loop_header_branch
          %177 = sbr.rel (%p175) target = $region46
        $region43: #{tpu_custom_call.1} parent=23 // loop_body
          %s179 = scalar_lea.sflag [#allocation3], %s174
          %s180 = smul.u32 1, 1
          %s181 = sshll.u32 %s180, 4
          %182 = dma.done %s179, %s181
        $region44: #{tpu_custom_call.1} parent=23 // loop_footer
          %s178 = sadd.s32 1, %s174
        $region45: #{tpu_custom_call.1} parent=23 // loop_footer_branch
          %173 = sbr.rel target = $region41
        $region46: #{tpu_custom_call.1} parent=23 // loop_exit
          _
        %v183 = vld [vmem:[#allocation2] sm:$0xff]
        %v184 = vld [vmem:[#allocation6] sm:$0xff]
        %v185 = vadd.f32 %v183, %v184
        %vm186 = vcmask 261120
        %187 = vst.msk [vmem:[%s140] sm:$0xff] %vm186, %v185
        %s188 = sand.u32 %s74, 1
        %s189 = scalar_lea.sflag [#allocation8], %s188
        %s190 = sand.u32 %s74, 1
        %s191 = smul.addr %s190, 8
        %s192 = scalar_lea.vmem [#allocation9], %s191
        // Predicated region
        $region47: #{tpu_custom_call.1} parent=23 // pred_check
          %p193 = pneg %p84
        $region48: #{tpu_custom_call.1} parent=23 // pred_check_branch
          %195 = sbr.rel (%p193) target = $region50
        $region49: #{tpu_custom_call.1} parent=23 // pred_region
          %197 = vsyncadd %s189, 0
          %s198 = sadd.s32 %s31, %s30
          %s199 = smul.addr %s198, 8
          %s200 = scalar_lea.hbm %s3, %s199
          %s202 = sshll.u32 %s192, 4
          %s203 = int_to_ptr.vmem [resolvable:$true] %s202
          %s204 = sshll.u32 %s200, 4
          %s205 = int_to_ptr.hbm [resolvable:$true] %s204
          %207 = dma.vmem_to_hbm [thread:$0]  %s203, 128, %s205, %s189
        $region50: #{tpu_custom_call.1} parent=23 // pred_fallthru
          _
      $region24: #{tpu_custom_call.1} parent=5 // pred_fallthru
        _
      %p208 = scmp.le.s32.totalorder 2, %s21
      // Predicated region
      $region51: #{tpu_custom_call.1} parent=5 // pred_check
        %p209 = pneg %p208
      $region52: #{tpu_custom_call.1} parent=5 // pred_check_branch
        %211 = sbr.rel (%p209) target = $region54
      $region53: #{tpu_custom_call.1} parent=5 // pred_region
        %s212 = ssub.s32 %s21, 2
        // Predicated region
        $region55: #{tpu_custom_call.1} parent=53 // pred_check
          %p213 = pneg %p90
        $region56: #{tpu_custom_call.1} parent=53 // pred_check_branch
          %215 = sbr.rel (%p213) target = $region58
        $region57: #{tpu_custom_call.1} parent=53 // pred_region
          %s216 = sand.u32 %s75, 1
          %s217 = scalar_lea.sflag [#allocation8], %s216
          %s218 = sand.u32 %s75, 1
          %s219 = smul.addr %s218, 8
          %s220 = scalar_lea.vmem [#allocation9], %s219
          %222 = dma.done %s217, 128
        $region58: #{tpu_custom_call.1} parent=53 // pred_fallthru
          _
      $region54: #{tpu_custom_call.1} parent=5 // pred_fallthru
        _
    $region6: #{tpu_custom_call.1} parent=1 // loop_footer
      %s25 = sadd.s32 1, %s21
    $region7: #{tpu_custom_call.1} parent=1 // loop_footer_branch
      %20 = sbr.rel target = $region3
    $region8: #{tpu_custom_call.1} parent=1 // loop_exit
      _
    %223 = vsyncpa [#allocation7], 1
    %s224 = scalar_lea.sflag [#allocation7], 1
    %225 = vsyncpa %s224, 1
    %226 = vsyncpa [#allocation8], 1
    %s227 = scalar_lea.sflag [#allocation8], 1
    %228 = vsyncpa %s227, 1
  %229 = vsyncmov [#allocation3]
  %s230 = vpop.sfrf %229
  %p231 = scmp.eq.s32.totalorder %s230, 0
  %p232 = pneg %p231
  %234 = shalt.err (%p232)
  %s235 = scalar_lea.sflag [#allocation3], 1
  %236 = vsyncmov %s235
  %s237 = vpop.sfrf %236
  %p238 = scmp.eq.s32.totalorder %s237, 0
  %p239 = pneg %p238
  %241 = shalt.err (%p239)
  %s242 = scalar_lea.sflag [#allocation3], 2
  %243 = vsyncmov %s242
  %s244 = vpop.sfrf %243
  %p245 = scmp.eq.s32.totalorder %s244, 0
  %p246 = pneg %p245
  %248 = shalt.err (%p246)
  %s249 = scalar_lea.sflag [#allocation3], 3
  %250 = vsyncmov %s249
  %s251 = vpop.sfrf %250
  %p252 = scmp.eq.s32.totalorder %s251, 0
  %p253 = pneg %p252
  %255 = shalt.err (%p253)
  %s256 = scalar_lea.sflag [#allocation3], 4
  %257 = vsyncmov %s256
  %s258 = vpop.sfrf %257
  %p259 = scmp.eq.s32.totalorder %s258, 0
  %p260 = pneg %p259
  %262 = shalt.err (%p260)
  %s263 = scalar_lea.sflag [#allocation3], 5
  %264 = vsyncmov %s263
  %s265 = vpop.sfrf %264
  %p266 = scmp.eq.s32.totalorder %s265, 0
  %p267 = pneg %p266
  %269 = shalt.err (%p267)
  %s270 = scalar_lea.sflag [#allocation3], 6
  %271 = vsyncmov %s270
  %s272 = vpop.sfrf %271
  %p273 = scmp.eq.s32.totalorder %s272, 0
  %p274 = pneg %p273
  %276 = shalt.err (%p274)
  %s277 = scalar_lea.sflag [#allocation3], 7
  %278 = vsyncmov %s277
  %s279 = vpop.sfrf %278
  %p280 = scmp.eq.s32.totalorder %s279, 0
  %p281 = pneg %p280
  %283 = shalt.err (%p281)

</llo_original>
